<compile_context>
chip_gen: v7x
topology: tpu7x:2x2x1
jax: 0.10.0
libtpu: 0.0.40
codegen_flags: <defaults>
</compile_context>

<pallas_src>
import jax
import jax.numpy as jnp
from jax import lax
from jax.experimental import pallas as pl
from jax.experimental.pallas import tpu as pltpu

EPS = 1e-5  # PyTorch BatchNorm1d default eps


# ----------------------------- Pallas kernel --------------------------------

def _bn_train(x):
    """BatchNorm1d(num_features=1), training mode, gamma=1 / beta=0.

    One-pass form: mean and biased variance from sum / sum-of-squares
    (E[x^2] - E[x]^2), halving the reduction count vs. the two-pass form and
    breaking the mean->var dependency.
    """
    inv_n = 1.0 / float(x.size)
    s = jnp.sum(x)
    ss = jnp.sum(x * x)
    m = s * inv_n
    v = jnp.maximum(ss * inv_n - m * m, 0.0)
    return (x - m) * lax.rsqrt(v + EPS)


def _sentence_lstm_kernel(x_ref, ph_ref, lstm_ref, h1_ref, h2_ref, packed_ref):
    """Fused LSTM recurrence + topic/stop heads.

    x_ref:      (T, E)          ctx (T = torch batch, acting as seq_len)
    ph_ref:     (T, H)          prev_hidden_state (squeezed)
    lstm_ref:   (E+H+1, 4H)     [w_ih ; w_hh ; b_ih+b_hh], gate order i,f,g,o
    h1_ref:     (2H+E+1, 4E)    block weight for the 4 pre-BN head terms + bias
                                rows [0:H]   -> hs   (cols [0:E]=W_t_h, [3E:4E]=W_stop_s)
                                rows [H:H+E] -> ctx  (cols [E:2E]=W_t_ctx)
                                rows [H+E:]  -> prev (cols [2E:3E]=W_stop_s_1)
    h2_ref:     (2E+1, E+2)     block-diag [W_topic 0 ; 0 W_stop] + bias
    packed_ref: (TP, PW)        [hs | topic | p_stop | c_n(bcast) | 0-pad], TP>=T rows
    """
    T, E = x_ref.shape
    H = ph_ref.shape[1]

    x = x_ref[...]                                   # (T, E)
    ph = ph_ref[...]                                 # (T, H)

    # --- recover weight pieces from the packed slabs (static slices) ---------
    w_ih = lstm_ref[0:E, :]                          # (E, 4H)
    w_hh = lstm_ref[E:E + H, :]                      # (H, 4H)
    b_l = lstm_ref[E + H:E + H + 1, :]               # (1, 4H)

    # --- hoisted input projection: one (T,E)@(E,4H) matmul + one bias add ----
    gates_x = (jnp.dot(x, w_ih, preferred_element_type=jnp.float32)
               + b_l)                                # (T, 4H)

    # --- LSTM recurrence, fully unrolled; h/c carried as vregs ---------------
    h = jnp.zeros((1, H), jnp.float32)
    c = jnp.zeros((1, H), jnp.float32)
    hs_rows = []
    for t in range(T):
        gates = gates_x[t:t + 1, :] + jnp.dot(
            h, w_hh, preferred_element_type=jnp.float32)     # (1, 4H)
        sg = jax.nn.sigmoid(gates)       # ONE EUP pass over the full 4H vreg
        tg = jnp.tanh(gates)             # ONE EUP pass over the full 4H vreg
        c = sg[:, H:2 * H] * c + sg[:, 0:H] * tg[:, 2 * H:3 * H]   # f*c + i*g
        h = sg[:, 3 * H:4 * H] * jnp.tanh(c)                       # o*tanh(c)
        hs_rows.append(h)
    hs = jnp.concatenate(hs_rows, axis=0)            # (T, H)

    # --- heads: all four pre-BN terms from ONE block-structured matmul -------
    w1 = h1_ref[0:2 * H + E, :]                      # (2H+E, 4E)
    b1 = h1_ref[2 * H + E:2 * H + E + 1, :]          # (1, 4E)
    lhs1 = jnp.concatenate([hs, x, ph], axis=1)      # (T, 2H+E)
    pre = (jnp.dot(lhs1, w1, preferred_element_type=jnp.float32)
           + b1)                                     # (T, 4E) = [a | b | c1 | c2]

    a = _bn_train(pre[:, 0:E])                       # bn_t_h   (W_t_h   @ hs)
    b2 = _bn_train(pre[:, E:2 * E])                  # bn_t_ctx (W_t_ctx @ ctx)
    c1 = _bn_train(pre[:, 2 * E:3 * E])              # bn_stop_s_1 (@ prev_h)
    c2 = _bn_train(pre[:, 3 * E:4 * E])              # bn_stop_s   (@ hs)
    acts = jax.nn.sigmoid(
        jnp.concatenate([a + b2, c1 + c2], axis=1))  # (T, 2E) = [t_act | s_act]

    # --- final projections: one block-diag matmul -> [topic | p_stop] --------
    w2 = h2_ref[0:2 * E, :]                          # (2E, E+2)
    b2v = h2_ref[2 * E:2 * E + 1, :]                 # (1, E+2)
    out2 = (jnp.dot(acts, w2, preferred_element_type=jnp.float32)
            + b2v)                                   # (T, E+2)

    # --- single unmasked (sublane+lane dense) packed store -------------------
    TP, PW = packed_ref.shape
    c_rows = jnp.broadcast_to(c, (T, H))             # c_n in the pad lanes
    used = 2 * H + E + 2
    pieces = [hs, out2, c_rows]
    if PW > used:
        pieces.append(jnp.zeros((T, PW - used), jnp.float32))
    body = jnp.concatenate(pieces, axis=1)           # (T, PW)
    if TP > T:
        body = jnp.concatenate(
            [body, jnp.zeros((TP - T, PW), jnp.float32)], axis=0)
    packed_ref[...] = body


# --------------------- one-time parameter packing ----------------------------

def pack_params(params):
    """Build the contiguous weight slabs ONCE (hoisted out of the call path)."""
    E = params["w_t_ctx"].shape[0]
    H = params["w_hh"].shape[0]

    # LSTM slab: [w_ih ; w_hh ; b]  -> (E+H+1, 4H)
    lstm_slab = jnp.concatenate(
        [params["w_ih"], params["w_hh"], params["b_lstm"]], axis=0)

    # Head-1 block weight (2H+E, 4E): cols = [a=W_t_h | b=W_t_ctx | c1=W_stop_s_1 | c2=W_stop_s]
    w1 = jnp.zeros((2 * H + E, 4 * E), jnp.float32)
    w1 = w1.at[0:H, 0:E].set(params["w_t_h"])
    w1 = w1.at[0:H, 3 * E:4 * E].set(params["w_stop_s"])
    w1 = w1.at[H:H + E, E:2 * E].set(params["w_t_ctx"])
    w1 = w1.at[H + E:2 * H + E, 2 * E:3 * E].set(params["w_stop_s_1"])
    b1 = jnp.concatenate([params["b_t_h"], params["b_t_ctx"],
                          params["b_stop_s_1"], params["b_stop_s"]], axis=1)
    head1_slab = jnp.concatenate([w1, b1], axis=0)   # (2H+E+1, 4E)

    # Head-2 block-diag weight (2E, E+2): [W_topic 0 ; 0 W_stop]
    w2 = jnp.zeros((2 * E, E + 2), jnp.float32)
    w2 = w2.at[0:E, 0:E].set(params["w_topic"])
    w2 = w2.at[E:2 * E, E:E + 2].set(params["w_stop"])
    b2 = jnp.concatenate([params["b_topic"], params["b_stop"]], axis=1)
    head2_slab = jnp.concatenate([w2, b2], axis=0)   # (2E+1, E+2)

    return {"E": E, "H": H, "lstm_slab": lstm_slab,
            "head1_slab": head1_slab, "head2_slab": head2_slab}


# ------------------------------ wrapper --------------------------------------

def sentence_lstm_forward(packed_params, ctx, prev_hidden_state):
    """ctx: (B, E) f32; prev_hidden_state: (B, 1, H) f32.

    Returns (topic (B,1,E), p_stop (B,1,2), hidden_state (B,1,H),
             states = (h_n (1,1,H), c_n (1,1,H))) — matching SentenceLSTM.v1.
    """
    T, E = ctx.shape
    H = packed_params["H"]
    assert packed_params["E"] == E

    PW = ((2 * H + E + 2 + 127) // 128) * 128        # lane-dense packed width
    TP = ((T + 7) // 8) * 8                          # sublane-full row count

    ph2 = prev_hidden_state.reshape(T, H)
    lstm_slab = packed_params["lstm_slab"]
    head1_slab = packed_params["head1_slab"]
    head2_slab = packed_params["head2_slab"]

    # Advisory cost estimate so XLA can schedule around this tiny custom call.
    flops = int(2 * T * (E * 4 * H          # input projection
                         + H * 4 * H        # recurrence matmuls
                         + (2 * H + E) * 4 * E   # merged head-1 matmul
                         + 2 * E * (E + 2)))     # merged head-2 matmul
    transcendentals = int(T * (8 * H + H + 2 * E) + 8)
    bytes_accessed = int(4 * (ctx.size + ph2.size + lstm_slab.size
                              + head1_slab.size + head2_slab.size + TP * PW))
    cost = pl.CostEstimate(flops=flops, transcendentals=transcendentals,
                           bytes_accessed=bytes_accessed)

    inputs = (ctx, ph2, lstm_slab, head1_slab, head2_slab)
    packed = pl.pallas_call(
        _sentence_lstm_kernel,
        out_shape=jax.ShapeDtypeStruct((TP, PW), jnp.float32),
        in_specs=[pl.BlockSpec(memory_space=pltpu.MemorySpace.VMEM)] * len(inputs),
        out_specs=pl.BlockSpec(memory_space=pltpu.MemorySpace.VMEM),
        cost_estimate=cost,
    )(*inputs)

    hs = packed[:T, :H]
    topic = packed[:T, H:H + E].reshape(T, 1, E)
    p_stop = packed[:T, H + E:H + E + 2].reshape(T, 1, 2)
    hidden_state = hs.reshape(T, 1, H)
    h_n = hs[T - 1:T].reshape(1, 1, H)               # final hidden = last hs row
    c_n = packed[T - 1:T, H + E + 2:H + E + 2 + H].reshape(1, 1, H)
    return topic, p_stop, hidden_state, (h_n, c_n)


# ------------------------- deterministic parameters ---------------------------

def init_params(key, embed_size, hidden_size):
    E, H = embed_size, hidden_size
    ks = jax.random.split(key, 12)

    def u(k, shape, lim):
        return jax.random.uniform(k, shape, jnp.float32, -lim, lim)

    k_lstm = 1.0 / (H ** 0.5)
    params = {
        # nn.LSTM params, pre-transposed to (in, 4H); gate order i,f,g,o
        "w_ih": u(ks[0], (E, 4 * H), k_lstm),
        "w_hh": u(ks[1], (H, 4 * H), k_lstm),
        "b_lstm": u(ks[2], (1, 4 * H), k_lstm) + u(ks[3], (1, 4 * H), k_lstm),
        # Linear layers: uniform(-0.1, 0.1) weights, zero bias (per __init_weight)
        "w_t_h": u(ks[4], (H, E), 0.1), "b_t_h": jnp.zeros((1, E), jnp.float32),
        "w_t_ctx": u(ks[5], (E, E), 0.1), "b_t_ctx": jnp.zeros((1, E), jnp.float32),
        "w_stop_s_1": u(ks[6], (H, E), 0.1),
        "b_stop_s_1": jnp.zeros((1, E), jnp.float32),
        "w_stop_s": u(ks[7], (H, E), 0.1),
        "b_stop_s": jnp.zeros((1, E), jnp.float32),
        "w_stop": u(ks[8], (E, 2), 0.1), "b_stop": jnp.zeros((1, 2), jnp.float32),
        "w_topic": u(ks[9], (E, E), 0.1), "b_topic": jnp.zeros((1, E), jnp.float32),
    }
    return params


# ------------------------------ reference ------------------------------------

def reference_forward(params, ctx, prev_hidden_state):
    B, E = ctx.shape
    H = params["w_hh"].shape[0]
    h = jnp.zeros((1, H), jnp.float32)
    c = jnp.zeros((1, H), jnp.float32)
    hs = []
    for t in range(B):
        g = (ctx[t:t + 1] @ params["w_ih"] + h @ params["w_hh"]
             + params["b_lstm"])
        i = jax.nn.sigmoid(g[:, :H])
        f = jax.nn.sigmoid(g[:, H:2 * H])
        gg = jnp.tanh(g[:, 2 * H:3 * H])
        o = jax.nn.sigmoid(g[:, 3 * H:])
        c = f * c + i * gg
        h = o * jnp.tanh(c)
        hs.append(h)
    hs = jnp.concatenate(hs, axis=0)

    def bn(x):
        m = jnp.mean(x)
        v = jnp.mean((x - m) ** 2)
        return (x - m) / jnp.sqrt(v + EPS)

    ph = prev_hidden_state.reshape(B, H)
    topic = (jax.nn.sigmoid(bn(hs @ params["w_t_h"] + params["b_t_h"])
                            + bn(ctx @ params["w_t_ctx"] + params["b_t_ctx"]))
             @ params["w_topic"] + params["b_topic"])
    p_stop = (jax.nn.sigmoid(
        bn(ph @ params["w_stop_s_1"] + params["b_stop_s_1"])
        + bn(hs @ params["w_stop_s"] + params["b_stop_s"]))
        @ params["w_stop"] + params["b_stop"])
    return topic, p_stop, hs, h, c


# --------------------------------- main ---------------------------------------

if __name__ == "__main__":
    B, E, H = 4, 32, 32   # small shapes: seq=4 (torch B), embed=32, hidden=32
    key = jax.random.PRNGKey(0)
    k_ctx, k_prev, k_params = jax.random.split(key, 3)

    ctx = jax.random.normal(k_ctx, (B, E), jnp.float32)
    prev_hidden_state = jax.random.normal(k_prev, (B, 1, H), jnp.float32)
    params = init_params(k_params, E, H)
    packed_params = pack_params(params)      # built ONCE, reused every call

    topic, p_stop, hidden_state, states = sentence_lstm_forward(
        packed_params, ctx, prev_hidden_state)
    jax.block_until_ready((topic, p_stop, hidden_state, states))

    # correctness check vs pure-JAX reference of the torch v1 semantics
    topic_ref, p_stop_ref, hs_ref, hN_ref, cN_ref = reference_forward(
        params, ctx, prev_hidden_state)
    assert topic.shape == (B, 1, E)
    assert p_stop.shape == (B, 1, 2)
    assert hidden_state.shape == (B, 1, H)
    assert states[0].shape == (1, 1, H) and states[1].shape == (1, 1, H)
    assert jnp.allclose(topic.reshape(B, E), topic_ref, atol=1e-4, rtol=1e-4)
    assert jnp.allclose(p_stop.reshape(B, 2), p_stop_ref, atol=1e-4, rtol=1e-4)
    assert jnp.allclose(hidden_state.reshape(B, H), hs_ref, atol=1e-4, rtol=1e-4)
    assert jnp.allclose(states[0].reshape(1, H), hN_ref, atol=1e-4, rtol=1e-4)
    assert jnp.allclose(states[1].reshape(1, H), cN_ref, atol=1e-4, rtol=1e-4)

    print("KERNEL_OK")
</pallas_src>

<mosaic_0001>
module attributes {stable_mosaic.version = 11 : i64} {
  func.func @_sentence_lstm_kernel(%arg0: memref<4x32xf32, #tpu.memory_space<vmem>>, %arg1: memref<4x32xf32, #tpu.memory_space<vmem>>, %arg2: memref<65x128xf32, #tpu.memory_space<vmem>>, %arg3: memref<97x128xf32, #tpu.memory_space<vmem>>, %arg4: memref<65x34xf32, #tpu.memory_space<vmem>>, %arg5: memref<8x128xf32, #tpu.memory_space<vmem>>) attributes {dimension_semantics = [], scalar_prefetch = 0 : i64, scratch_operands = 0 : i64, tpu.core_type = #tpu.core_type<tc>} {
    %c0 = arith.constant 0 : index
    %c0_0 = arith.constant 0 : index
    %0 = vector.load %arg0[%c0, %c0_0] : memref<4x32xf32, #tpu.memory_space<vmem>>, vector<4x32xf32>
    %c0_1 = arith.constant 0 : index
    %c0_2 = arith.constant 0 : index
    %1 = vector.load %arg1[%c0_1, %c0_2] : memref<4x32xf32, #tpu.memory_space<vmem>>, vector<4x32xf32>
    %c0_3 = arith.constant 0 : index
    %c0_4 = arith.constant 0 : index
    %2 = vector.load %arg2[%c0_3, %c0_4] : memref<65x128xf32, #tpu.memory_space<vmem>>, vector<32x128xf32>
    %c32 = arith.constant 32 : index
    %c0_5 = arith.constant 0 : index
    %3 = vector.load %arg2[%c32, %c0_5] : memref<65x128xf32, #tpu.memory_space<vmem>>, vector<32x128xf32>
    %c64 = arith.constant 64 : index
    %c0_6 = arith.constant 0 : index
    %4 = vector.load %arg2[%c64, %c0_6] : memref<65x128xf32, #tpu.memory_space<vmem>>, vector<1x128xf32>
    %cst = arith.constant dense<0.000000e+00> : vector<4x128xf32>
    %5 = tpu.matmul %0, %2, %cst {dimension_numbers = #tpu.dot_dimension_numbers<[1], [0], [0], [1], [0, 0, 1, 1], [], []>} : vector<4x32xf32>, vector<32x128xf32>, vector<4x128xf32> -> vector<4x128xf32>
    %6 = vector.broadcast %4 : vector<1x128xf32> to vector<4x128xf32>
    %7 = arith.addf %5, %6 : vector<4x128xf32>
    %cst_7 = arith.constant 0.000000e+00 : f32
    %8 = vector.broadcast %cst_7 : f32 to vector<1x32xf32>
    %cst_8 = arith.constant 0.000000e+00 : f32
    %9 = vector.broadcast %cst_8 : f32 to vector<1x32xf32>
    %10 = vector.extract_strided_slice %7 {offsets = [0, 0], sizes = [1, 128], strides = [1, 1]} : vector<4x128xf32> to vector<1x128xf32>
    %cst_9 = arith.constant dense<0.000000e+00> : vector<1x128xf32>
    %11 = tpu.matmul %8, %3, %cst_9 {dimension_numbers = #tpu.dot_dimension_numbers<[1], [0], [0], [1], [0, 0, 1, 1], [], []>} : vector<1x32xf32>, vector<32x128xf32>, vector<1x128xf32> -> vector<1x128xf32>
    %12 = arith.addf %10, %11 : vector<1x128xf32>
    %13 = arith.negf %12 : vector<1x128xf32>
    %14 = math.exp %13 : vector<1x128xf32>
    %cst_10 = arith.constant 1.000000e+00 : f32
    %15 = vector.broadcast %cst_10 : f32 to vector<1x128xf32>
    %16 = arith.addf %15, %14 : vector<1x128xf32>
    %17 = arith.divf %15, %16 : vector<1x128xf32>
    %18 = math.tanh %12 : vector<1x128xf32>
    %19 = vector.extract_strided_slice %17 {offsets = [0, 32], sizes = [1, 32], strides = [1, 1]} : vector<1x128xf32> to vector<1x32xf32>
    %20 = arith.mulf %19, %9 : vector<1x32xf32>
    %21 = vector.extract_strided_slice %17 {offsets = [0, 0], sizes = [1, 32], strides = [1, 1]} : vector<1x128xf32> to vector<1x32xf32>
    %22 = vector.extract_strided_slice %18 {offsets = [0, 64], sizes = [1, 32], strides = [1, 1]} : vector<1x128xf32> to vector<1x32xf32>
    %23 = arith.mulf %21, %22 : vector<1x32xf32>
    %24 = arith.addf %20, %23 : vector<1x32xf32>
    %25 = vector.extract_strided_slice %17 {offsets = [0, 96], sizes = [1, 32], strides = [1, 1]} : vector<1x128xf32> to vector<1x32xf32>
    %26 = math.tanh %24 : vector<1x32xf32>
    %27 = arith.mulf %25, %26 : vector<1x32xf32>
    %28 = vector.extract_strided_slice %7 {offsets = [1, 0], sizes = [1, 128], strides = [1, 1]} : vector<4x128xf32> to vector<1x128xf32>
    %cst_11 = arith.constant dense<0.000000e+00> : vector<1x128xf32>
    %29 = tpu.matmul %27, %3, %cst_11 {dimension_numbers = #tpu.dot_dimension_numbers<[1], [0], [0], [1], [0, 0, 1, 1], [], []>} : vector<1x32xf32>, vector<32x128xf32>, vector<1x128xf32> -> vector<1x128xf32>
    %30 = arith.addf %28, %29 : vector<1x128xf32>
    %31 = arith.negf %30 : vector<1x128xf32>
    %32 = math.exp %31 : vector<1x128xf32>
    %cst_12 = arith.constant 1.000000e+00 : f32
    %33 = vector.broadcast %cst_12 : f32 to vector<1x128xf32>
    %34 = arith.addf %33, %32 : vector<1x128xf32>
    %35 = arith.divf %33, %34 : vector<1x128xf32>
    %36 = math.tanh %30 : vector<1x128xf32>
    %37 = vector.extract_strided_slice %35 {offsets = [0, 32], sizes = [1, 32], strides = [1, 1]} : vector<1x128xf32> to vector<1x32xf32>
    %38 = arith.mulf %37, %24 : vector<1x32xf32>
    %39 = vector.extract_strided_slice %35 {offsets = [0, 0], sizes = [1, 32], strides = [1, 1]} : vector<1x128xf32> to vector<1x32xf32>
    %40 = vector.extract_strided_slice %36 {offsets = [0, 64], sizes = [1, 32], strides = [1, 1]} : vector<1x128xf32> to vector<1x32xf32>
    %41 = arith.mulf %39, %40 : vector<1x32xf32>
    %42 = arith.addf %38, %41 : vector<1x32xf32>
    %43 = vector.extract_strided_slice %35 {offsets = [0, 96], sizes = [1, 32], strides = [1, 1]} : vector<1x128xf32> to vector<1x32xf32>
    %44 = math.tanh %42 : vector<1x32xf32>
    %45 = arith.mulf %43, %44 : vector<1x32xf32>
    %46 = vector.extract_strided_slice %7 {offsets = [2, 0], sizes = [1, 128], strides = [1, 1]} : vector<4x128xf32> to vector<1x128xf32>
    %cst_13 = arith.constant dense<0.000000e+00> : vector<1x128xf32>
    %47 = tpu.matmul %45, %3, %cst_13 {dimension_numbers = #tpu.dot_dimension_numbers<[1], [0], [0], [1], [0, 0, 1, 1], [], []>} : vector<1x32xf32>, vector<32x128xf32>, vector<1x128xf32> -> vector<1x128xf32>
    %48 = arith.addf %46, %47 : vector<1x128xf32>
    %49 = arith.negf %48 : vector<1x128xf32>
    %50 = math.exp %49 : vector<1x128xf32>
    %cst_14 = arith.constant 1.000000e+00 : f32
    %51 = vector.broadcast %cst_14 : f32 to vector<1x128xf32>
    %52 = arith.addf %51, %50 : vector<1x128xf32>
    %53 = arith.divf %51, %52 : vector<1x128xf32>
    %54 = math.tanh %48 : vector<1x128xf32>
    %55 = vector.extract_strided_slice %53 {offsets = [0, 32], sizes = [1, 32], strides = [1, 1]} : vector<1x128xf32> to vector<1x32xf32>
    %56 = arith.mulf %55, %42 : vector<1x32xf32>
    %57 = vector.extract_strided_slice %53 {offsets = [0, 0], sizes = [1, 32], strides = [1, 1]} : vector<1x128xf32> to vector<1x32xf32>
    %58 = vector.extract_strided_slice %54 {offsets = [0, 64], sizes = [1, 32], strides = [1, 1]} : vector<1x128xf32> to vector<1x32xf32>
    %59 = arith.mulf %57, %58 : vector<1x32xf32>
    %60 = arith.addf %56, %59 : vector<1x32xf32>
    %61 = vector.extract_strided_slice %53 {offsets = [0, 96], sizes = [1, 32], strides = [1, 1]} : vector<1x128xf32> to vector<1x32xf32>
    %62 = math.tanh %60 : vector<1x32xf32>
    %63 = arith.mulf %61, %62 : vector<1x32xf32>
    %64 = vector.extract_strided_slice %7 {offsets = [3, 0], sizes = [1, 128], strides = [1, 1]} : vector<4x128xf32> to vector<1x128xf32>
    %cst_15 = arith.constant dense<0.000000e+00> : vector<1x128xf32>
    %65 = tpu.matmul %63, %3, %cst_15 {dimension_numbers = #tpu.dot_dimension_numbers<[1], [0], [0], [1], [0, 0, 1, 1], [], []>} : vector<1x32xf32>, vector<32x128xf32>, vector<1x128xf32> -> vector<1x128xf32>
    %66 = arith.addf %64, %65 : vector<1x128xf32>
    %67 = arith.negf %66 : vector<1x128xf32>
    %68 = math.exp %67 : vector<1x128xf32>
    %cst_16 = arith.constant 1.000000e+00 : f32
    %69 = vector.broadcast %cst_16 : f32 to vector<1x128xf32>
    %70 = arith.addf %69, %68 : vector<1x128xf32>
    %71 = arith.divf %69, %70 : vector<1x128xf32>
    %72 = math.tanh %66 : vector<1x128xf32>
    %73 = vector.extract_strided_slice %71 {offsets = [0, 32], sizes = [1, 32], strides = [1, 1]} : vector<1x128xf32> to vector<1x32xf32>
    %74 = arith.mulf %73, %60 : vector<1x32xf32>
    %75 = vector.extract_strided_slice %71 {offsets = [0, 0], sizes = [1, 32], strides = [1, 1]} : vector<1x128xf32> to vector<1x32xf32>
    %76 = vector.extract_strided_slice %72 {offsets = [0, 64], sizes = [1, 32], strides = [1, 1]} : vector<1x128xf32> to vector<1x32xf32>
    %77 = arith.mulf %75, %76 : vector<1x32xf32>
    %78 = arith.addf %74, %77 : vector<1x32xf32>
    %79 = vector.extract_strided_slice %71 {offsets = [0, 96], sizes = [1, 32], strides = [1, 1]} : vector<1x128xf32> to vector<1x32xf32>
    %80 = math.tanh %78 : vector<1x32xf32>
    %81 = arith.mulf %79, %80 : vector<1x32xf32>
    %82 = tpu.concatenate %27, %45, %63, %81 in 0 : vector<1x32xf32>, vector<1x32xf32>, vector<1x32xf32>, vector<1x32xf32> -> vector<4x32xf32>
    %c0_17 = arith.constant 0 : index
    %c0_18 = arith.constant 0 : index
    %83 = vector.load %arg3[%c0_17, %c0_18] : memref<97x128xf32, #tpu.memory_space<vmem>>, vector<96x128xf32>
    %c96 = arith.constant 96 : index
    %c0_19 = arith.constant 0 : index
    %84 = vector.load %arg3[%c96, %c0_19] : memref<97x128xf32, #tpu.memory_space<vmem>>, vector<1x128xf32>
    %85 = tpu.concatenate %82, %0, %1 in 1 : vector<4x32xf32>, vector<4x32xf32>, vector<4x32xf32> -> vector<4x96xf32>
    %cst_20 = arith.constant dense<0.000000e+00> : vector<4x128xf32>
    %86 = tpu.matmul %85, %83, %cst_20 {dimension_numbers = #tpu.dot_dimension_numbers<[1], [0], [0], [1], [0, 0, 1, 1], [], []>} : vector<4x96xf32>, vector<96x128xf32>, vector<4x128xf32> -> vector<4x128xf32>
    %87 = vector.broadcast %84 : vector<1x128xf32> to vector<4x128xf32>
    %88 = arith.addf %86, %87 : vector<4x128xf32>
    %89 = vector.extract_strided_slice %88 {offsets = [0, 0], sizes = [4, 32], strides = [1, 1]} : vector<4x128xf32> to vector<4x32xf32>
    %90 = vector.shape_cast %89 : vector<4x32xf32> to vector<1x4x32xf32>
    %cst_21 = arith.constant dense<0.000000e+00> : vector<1xf32>
    %91 = vector.multi_reduction <add>, %90, %cst_21 [1, 2] : vector<1x4x32xf32> to vector<1xf32>
    %92 = vector.shape_cast %91 : vector<1xf32> to vector<1x1x1xf32>
    %93 = vector.extract %92[0, 0, 0] : f32 from vector<1x1x1xf32>
    %94 = arith.mulf %89, %89 : vector<4x32xf32>
    %95 = vector.shape_cast %94 : vector<4x32xf32> to vector<1x4x32xf32>
    %cst_22 = arith.constant dense<0.000000e+00> : vector<1xf32>
    %96 = vector.multi_reduction <add>, %95, %cst_22 [1, 2] : vector<1x4x32xf32> to vector<1xf32>
    %97 = vector.shape_cast %96 : vector<1xf32> to vector<1x1x1xf32>
    %98 = vector.extract %97[0, 0, 0] : f32 from vector<1x1x1xf32>
    %cst_23 = arith.constant 7.812500e-03 : f32
    %99 = arith.mulf %93, %cst_23 : f32
    %cst_24 = arith.constant 7.812500e-03 : f32
    %100 = arith.mulf %98, %cst_24 : f32
    %101 = arith.mulf %99, %99 : f32
    %102 = arith.subf %100, %101 : f32
    %cst_25 = arith.constant 0.000000e+00 : f32
    %103 = arith.maximumf %102, %cst_25 : f32
    %104 = vector.broadcast %99 : f32 to vector<4x32xf32>
    %105 = arith.subf %89, %104 : vector<4x32xf32>
    %cst_26 = arith.constant 9.99999974E-6 : f32
    %106 = arith.addf %103, %cst_26 : f32
    %107 = math.rsqrt %106 : f32
    %108 = vector.broadcast %107 : f32 to vector<4x32xf32>
    %109 = arith.mulf %105, %108 : vector<4x32xf32>
    %110 = vector.extract_strided_slice %88 {offsets = [0, 32], sizes = [4, 32], strides = [1, 1]} : vector<4x128xf32> to vector<4x32xf32>
    %111 = vector.shape_cast %110 : vector<4x32xf32> to vector<1x4x32xf32>
    %cst_27 = arith.constant dense<0.000000e+00> : vector<1xf32>
    %112 = vector.multi_reduction <add>, %111, %cst_27 [1, 2] : vector<1x4x32xf32> to vector<1xf32>
    %113 = vector.shape_cast %112 : vector<1xf32> to vector<1x1x1xf32>
    %114 = vector.extract %113[0, 0, 0] : f32 from vector<1x1x1xf32>
    %115 = arith.mulf %110, %110 : vector<4x32xf32>
    %116 = vector.shape_cast %115 : vector<4x32xf32> to vector<1x4x32xf32>
    %cst_28 = arith.constant dense<0.000000e+00> : vector<1xf32>
    %117 = vector.multi_reduction <add>, %116, %cst_28 [1, 2] : vector<1x4x32xf32> to vector<1xf32>
    %118 = vector.shape_cast %117 : vector<1xf32> to vector<1x1x1xf32>
    %119 = vector.extract %118[0, 0, 0] : f32 from vector<1x1x1xf32>
    %cst_29 = arith.constant 7.812500e-03 : f32
    %120 = arith.mulf %114, %cst_29 : f32
    %cst_30 = arith.constant 7.812500e-03 : f32
    %121 = arith.mulf %119, %cst_30 : f32
    %122 = arith.mulf %120, %120 : f32
    %123 = arith.subf %121, %122 : f32
    %cst_31 = arith.constant 0.000000e+00 : f32
    %124 = arith.maximumf %123, %cst_31 : f32
    %125 = vector.broadcast %120 : f32 to vector<4x32xf32>
    %126 = arith.subf %110, %125 : vector<4x32xf32>
    %cst_32 = arith.constant 9.99999974E-6 : f32
    %127 = arith.addf %124, %cst_32 : f32
    %128 = math.rsqrt %127 : f32
    %129 = vector.broadcast %128 : f32 to vector<4x32xf32>
    %130 = arith.mulf %126, %129 : vector<4x32xf32>
    %131 = vector.extract_strided_slice %88 {offsets = [0, 64], sizes = [4, 32], strides = [1, 1]} : vector<4x128xf32> to vector<4x32xf32>
    %132 = vector.shape_cast %131 : vector<4x32xf32> to vector<1x4x32xf32>
    %cst_33 = arith.constant dense<0.000000e+00> : vector<1xf32>
    %133 = vector.multi_reduction <add>, %132, %cst_33 [1, 2] : vector<1x4x32xf32> to vector<1xf32>
    %134 = vector.shape_cast %133 : vector<1xf32> to vector<1x1x1xf32>
    %135 = vector.extract %134[0, 0, 0] : f32 from vector<1x1x1xf32>
    %136 = arith.mulf %131, %131 : vector<4x32xf32>
    %137 = vector.shape_cast %136 : vector<4x32xf32> to vector<1x4x32xf32>
    %cst_34 = arith.constant dense<0.000000e+00> : vector<1xf32>
    %138 = vector.multi_reduction <add>, %137, %cst_34 [1, 2] : vector<1x4x32xf32> to vector<1xf32>
    %139 = vector.shape_cast %138 : vector<1xf32> to vector<1x1x1xf32>
    %140 = vector.extract %139[0, 0, 0] : f32 from vector<1x1x1xf32>
    %cst_35 = arith.constant 7.812500e-03 : f32
    %141 = arith.mulf %135, %cst_35 : f32
    %cst_36 = arith.constant 7.812500e-03 : f32
    %142 = arith.mulf %140, %cst_36 : f32
    %143 = arith.mulf %141, %141 : f32
    %144 = arith.subf %142, %143 : f32
    %cst_37 = arith.constant 0.000000e+00 : f32
    %145 = arith.maximumf %144, %cst_37 : f32
    %146 = vector.broadcast %141 : f32 to vector<4x32xf32>
    %147 = arith.subf %131, %146 : vector<4x32xf32>
    %cst_38 = arith.constant 9.99999974E-6 : f32
    %148 = arith.addf %145, %cst_38 : f32
    %149 = math.rsqrt %148 : f32
    %150 = vector.broadcast %149 : f32 to vector<4x32xf32>
    %151 = arith.mulf %147, %150 : vector<4x32xf32>
    %152 = vector.extract_strided_slice %88 {offsets = [0, 96], sizes = [4, 32], strides = [1, 1]} : vector<4x128xf32> to vector<4x32xf32>
    %153 = vector.shape_cast %152 : vector<4x32xf32> to vector<1x4x32xf32>
    %cst_39 = arith.constant dense<0.000000e+00> : vector<1xf32>
    %154 = vector.multi_reduction <add>, %153, %cst_39 [1, 2] : vector<1x4x32xf32> to vector<1xf32>
    %155 = vector.shape_cast %154 : vector<1xf32> to vector<1x1x1xf32>
    %156 = vector.extract %155[0, 0, 0] : f32 from vector<1x1x1xf32>
    %157 = arith.mulf %152, %152 : vector<4x32xf32>
    %158 = vector.shape_cast %157 : vector<4x32xf32> to vector<1x4x32xf32>
    %cst_40 = arith.constant dense<0.000000e+00> : vector<1xf32>
    %159 = vector.multi_reduction <add>, %158, %cst_40 [1, 2] : vector<1x4x32xf32> to vector<1xf32>
    %160 = vector.shape_cast %159 : vector<1xf32> to vector<1x1x1xf32>
    %161 = vector.extract %160[0, 0, 0] : f32 from vector<1x1x1xf32>
    %cst_41 = arith.constant 7.812500e-03 : f32
    %162 = arith.mulf %156, %cst_41 : f32
    %cst_42 = arith.constant 7.812500e-03 : f32
    %163 = arith.mulf %161, %cst_42 : f32
    %164 = arith.mulf %162, %162 : f32
    %165 = arith.subf %163, %164 : f32
    %cst_43 = arith.constant 0.000000e+00 : f32
    %166 = arith.maximumf %165, %cst_43 : f32
    %167 = vector.broadcast %162 : f32 to vector<4x32xf32>
    %168 = arith.subf %152, %167 : vector<4x32xf32>
    %cst_44 = arith.constant 9.99999974E-6 : f32
    %169 = arith.addf %166, %cst_44 : f32
    %170 = math.rsqrt %169 : f32
    %171 = vector.broadcast %170 : f32 to vector<4x32xf32>
    %172 = arith.mulf %168, %171 : vector<4x32xf32>
    %173 = arith.addf %109, %130 : vector<4x32xf32>
    %174 = arith.addf %151, %172 : vector<4x32xf32>
    %175 = tpu.concatenate %173, %174 in 1 : vector<4x32xf32>, vector<4x32xf32> -> vector<4x64xf32>
    %176 = arith.negf %175 : vector<4x64xf32>
    %177 = math.exp %176 : vector<4x64xf32>
    %cst_45 = arith.constant 1.000000e+00 : f32
    %178 = vector.broadcast %cst_45 : f32 to vector<4x64xf32>
    %179 = arith.addf %178, %177 : vector<4x64xf32>
    %180 = arith.divf %178, %179 : vector<4x64xf32>
    %c0_46 = arith.constant 0 : index
    %c0_47 = arith.constant 0 : index
    %181 = vector.load %arg4[%c0_46, %c0_47] : memref<65x34xf32, #tpu.memory_space<vmem>>, vector<64x34xf32>
    %c64_48 = arith.constant 64 : index
    %c0_49 = arith.constant 0 : index
    %182 = vector.load %arg4[%c64_48, %c0_49] : memref<65x34xf32, #tpu.memory_space<vmem>>, vector<1x34xf32>
    %cst_50 = arith.constant dense<0.000000e+00> : vector<4x34xf32>
    %183 = tpu.matmul %180, %181, %cst_50 {dimension_numbers = #tpu.dot_dimension_numbers<[1], [0], [0], [1], [0, 0, 1, 1], [], []>} : vector<4x64xf32>, vector<64x34xf32>, vector<4x34xf32> -> vector<4x34xf32>
    %184 = vector.broadcast %182 : vector<1x34xf32> to vector<4x34xf32>
    %185 = arith.addf %183, %184 : vector<4x34xf32>
    %186 = vector.shape_cast %78 : vector<1x32xf32> to vector<1x32xf32>
    %187 = vector.broadcast %186 : vector<1x32xf32> to vector<4x32xf32>
    %cst_51 = arith.constant 0.000000e+00 : f32
    %188 = vector.broadcast %cst_51 : f32 to vector<4x30xf32>
    %189 = tpu.concatenate %82, %185, %187, %188 in 1 : vector<4x32xf32>, vector<4x34xf32>, vector<4x32xf32>, vector<4x30xf32> -> vector<4x128xf32>
    %cst_52 = arith.constant 0.000000e+00 : f32
    %190 = vector.broadcast %cst_52 : f32 to vector<4x128xf32>
    %191 = tpu.concatenate %189, %190 in 0 : vector<4x128xf32>, vector<4x128xf32> -> vector<8x128xf32>
    %c0_53 = arith.constant 0 : index
    %c0_54 = arith.constant 0 : index
    %192 = vector.load %arg5[%c0_53, %c0_54] : memref<8x128xf32, #tpu.memory_space<vmem>>, vector<8x128xf32>
    tpu.vector_store %arg5[%c0_53, %c0_54], %191 {strides = array<i32>} : memref<8x128xf32, #tpu.memory_space<vmem>>, vector<8x128xf32>,
    return
  }
}

</mosaic_0001>

<llo_original>
// kernel: tpu_custom_call.1
$region0: #{tpu_custom_call.1}
  #allocation0 [shape = 'u32[]', space=smem, size = 0x4, offset = 0x4, fixed_abs, tag = 'smem constant byte address 0x4 - core index']
  #allocation1 [shape = 'u32[144,128]{1,0:T(1,128)}', space=vmem, size = 0x12000, scoped, tag = 'internal scratch']
  %s0 = inlined_call_operand.vmem [shape: f32[4,32], index: 0, kind: input, shape index: {}]
  %s1 = inlined_call_operand.vmem [shape: f32[4,32], index: 1, kind: input, shape index: {}]
  %s2 = inlined_call_operand.hbm [shape: f32[65,128], index: 2, kind: input, shape index: {}]
  %s3 = inlined_call_operand.vmem [shape: f32[97,128], index: 3, kind: input, shape index: {}]
  %s4 = inlined_call_operand.vmem [shape: f32[65,34], index: 4, kind: input, shape index: {}]
  %s5 = inlined_call_operand.hbm [shape: f32[8,128], index: 5, kind: output, shape index: {}]
  %s6 = sld [smem:[#allocation0]]
  $region34: #{tpu_custom_call.1} parent=0
    _
  %s8 = ssub.s32 1, %s6
  %s9 = scalar_select 0, %s8, %s6
  $region1: #{tpu_custom_call.1} parent=0
    #allocation2 [shape = 'u8[36864]{0}', space=vmem, size = 0x9000, scoped, tag = 'input window, operand 2, single buffered']
    #allocation3 [shape = 's32[1]{0}', space=sflag, size = 0x4, scoped, tag = 'scoped memory for tpu_custom_call.1']
    #allocation4 [shape = 's32[1]{0}', space=sflag, size = 0x4, scoped, tag = 'scoped memory for tpu_custom_call.1']
    #allocation5 [shape = 'u8[4096]{0}', space=vmem, size = 0x1000, scoped, tag = 'output window, operand 0, single buffered']
    %10 = vsyncpa [#allocation3], 0
    %11 = vsyncpa [#allocation4], 0
    // Predicated region
    $region2: #{tpu_custom_call.1} parent=1 // pred_check
      _
    $region3: #{tpu_custom_call.1} parent=1 // pred_check_branch
      %13 = sbr.rel (0) target = $region5
    $region4: #{tpu_custom_call.1} parent=1 // pred_region
      _
    $region5: #{tpu_custom_call.1} parent=1 // pred_fallthru
      _
    // Predicated region
    $region6: #{tpu_custom_call.1} parent=1 // pred_check
      _
    $region7: #{tpu_custom_call.1} parent=1 // pred_check_branch
      %15 = sbr.rel (0) target = $region9
    $region8: #{tpu_custom_call.1} parent=1 // pred_region
      _
    $region9: #{tpu_custom_call.1} parent=1 // pred_fallthru
      _
    // Predicated region
    $region10: #{tpu_custom_call.1} parent=1 // pred_check
      _
    $region11: #{tpu_custom_call.1} parent=1 // pred_check_branch
      %17 = sbr.rel (0) target = $region13
    $region12: #{tpu_custom_call.1} parent=1 // pred_region
      %s19 = ssub.s32 1152, 1152
      %20 = vsyncadd [#allocation3], %s19
      %s21 = sshll.u32 [#allocation2], 4
      %s22 = int_to_ptr.vmem [resolvable:$true] %s21
      %27 = dma.hbm_to_vmem [thread:$0]  %s2, 1152, %s22, [#allocation3], 128, 128, 8
    $region13: #{tpu_custom_call.1} parent=1 // pred_fallthru
      _
    // Predicated region
    $region14: #{tpu_custom_call.1} parent=1 // pred_check
      _
    $region15: #{tpu_custom_call.1} parent=1 // pred_check_branch
      %29 = sbr.rel (0) target = $region17
    $region16: #{tpu_custom_call.1} parent=1 // pred_region
      _
    $region17: #{tpu_custom_call.1} parent=1 // pred_fallthru
      _
    // Predicated region
    $region18: #{tpu_custom_call.1} parent=1 // pred_check
      _
    $region19: #{tpu_custom_call.1} parent=1 // pred_check_branch
      %31 = sbr.rel (0) target = $region21
    $region20: #{tpu_custom_call.1} parent=1 // pred_region
      _
    $region21: #{tpu_custom_call.1} parent=1 // pred_fallthru
      _
    // Predicated region
    $region22: #{tpu_custom_call.1} parent=1 // pred_check
      _
    $region23: #{tpu_custom_call.1} parent=1 // pred_check_branch
      %33 = sbr.rel (0) target = $region25
    $region24: #{tpu_custom_call.1} parent=1 // pred_region
      %34 = dma.done [#allocation3], 1152
    $region25: #{tpu_custom_call.1} parent=1 // pred_fallthru
      _
    %v35 = vld [vmem:[%s0] sm:$0xf]
    %v36 = vld [vmem:[%s1] sm:$0xf]
    %v37 = vld [vmem:[#allocation2] sm:$0xff]
    %v38 = vld [vmem:[#allocation2 + $0x8] sm:$0xff]
    %v39 = vld [vmem:[#allocation2 + $0x10] sm:$0xff]
    %v40 = vld [vmem:[#allocation2 + $0x18] sm:$0xff]
    %v41 = vld [vmem:[#allocation2 + $0x20] sm:$0xff]
    %v42 = vld [vmem:[#allocation2 + $0x28] sm:$0xff]
    %v43 = vld [vmem:[#allocation2 + $0x30] sm:$0xff]
    %v44 = vld [vmem:[#allocation2 + $0x38] sm:$0xff]
    %v45 = vld [vmem:[#allocation2 + $0x40] sm:$0x1]
    %v46 = vlaneseq
    %v47 = vshrl.u32 %v46, 7
    %v48 = vsub.s32 0, %v47
    %v49 = vrot.slane %v45, %v48
    %vm50 = vcmask 261120
    %v52 = vsel %vm50, %v35, 0
    %54 = vmatprep.subr.mxu0 0.0
    %55 = vmatpush1.msra.mxu0 %v37
    %56 = vmatprep.subr.mxu0 0.0
    %57 = vmatpush1.msra.mxu0 %v38
    %58 = vmatprep.subr.mxu0 0.0
    %59 = vmatpush1.msra.mxu0 %v39
    %60 = vmatprep.subr.mxu0 0.0
    %61 = vmatpush1.msra.mxu0 %v40
    %62 = vmatprep.subr.mxu0 0.0
    %63 = vmatpush1.msra.mxu0 0.0
    %64 = vmatprep.subr.mxu0 0.0
    %65 = vmatpush1.msra.mxu0 0.0
    %66 = vmatprep.subr.mxu0 0.0
    %67 = vmatpush1.msra.mxu0 0.0
    %68 = vmatprep.subr.mxu0 0.0
    %69 = vmatpush1.msra.mxu0 0.0
    %70 = vmatprep.subr.mxu0 0.0
    %71 = vmatpush1.msra.mxu0 0.0
    %72 = vmatprep.subr.mxu0 0.0
    %73 = vmatpush1.msra.mxu0 0.0
    %74 = vmatprep.subr.mxu0 0.0
    %75 = vmatpush1.msra.mxu0 0.0
    %76 = vmatprep.subr.mxu0 0.0
    %77 = vmatpush1.msra.mxu0 0.0
    %78 = vmatprep.subr.mxu0 0.0
    %79 = vmatpush1.msra.mxu0 0.0
    %80 = vmatprep.subr.mxu0 0.0
    %81 = vmatpush1.msra.mxu0 0.0
    %82 = vmatprep.subr.mxu0 0.0
    %83 = vmatpush1.msra.mxu0 0.0
    %84 = vmatprep.subr.mxu0 0.0
    %85 = vmatpush1.msra.mxu0 0.0
    %86 = vmatprep.subr.mxu0 0.0
    %87 = vmatpush1.msra.mxu0 0.0
    %88 = vmatprep.subr.mxu0 0.0
    %89 = vmatpush1.msra.mxu0 0.0
    %90 = vmatprep.subr.mxu0 0.0
    %91 = vmatpush1.msra.mxu0 0.0
    %92 = vmatprep.subr.mxu0 0.0
    %93 = vmatpush1.msra.mxu0 0.0
    %94 = vmatprep.subr.mxu0 0.0
    %95 = vmatpush1.msra.mxu0 0.0
    %96 = vmatprep.subr.mxu0 0.0
    %97 = vmatpush1.msra.mxu0 0.0
    %98 = vmatprep.subr.mxu0 0.0
    %99 = vmatpush1.msra.mxu0 0.0
    %100 = vmatprep.subr.mxu0 0.0
    %101 = vmatpush1.msra.mxu0 0.0
    %102 = vmatprep.subr.mxu0 0.0
    %103 = vmatpush1.msra.mxu0 0.0
    %104 = vmatprep.subr.mxu0 0.0
    %105 = vmatpush1.msra.mxu0 0.0
    %106 = vmatprep.subr.mxu0 0.0
    %107 = vmatpush1.msra.mxu0 0.0
    %108 = vmatprep.subr.mxu0 0.0
    %109 = vmatpush1.msra.mxu0 0.0
    %110 = vmatprep.subr.mxu0 0.0
    %111 = vmatpush1.msra.mxu0 0.0
    %112 = vmatprep.subr.mxu0 0.0
    %113 = vmatpush1.msra.mxu0 0.0
    %114 = vmatprep.subr.mxu0 0.0
    %115 = vmatpush1.msra.mxu0 0.0
    %116 = vmatprep.subr.mxu0 0.0
    %117 = vmatpush1.msra.mxu0 0.0
    %118 = vmatprep.mubr.f32.mxu0 0.0
    %119 = vmatmul.mubr.f32.gmra.mrb[0].mxu0 %v52
    %v120 = vpop.f32.mrb[0].mxu0
    %v121 = vadd.f32 %v49, %v120
    %v122 = vpop.f32.mrb[0].mxu0
    %123 = vdwg.mxu0
    %v125 = vsel %vm50, 0.0, 0
    %127 = vmatprep.subr.mxu0 0.0
    %128 = vmatpush1.msra.mxu0 %v41
    %129 = vmatprep.subr.mxu0 0.0
    %130 = vmatpush1.msra.mxu0 %v42
    %131 = vmatprep.subr.mxu0 0.0
    %132 = vmatpush1.msra.mxu0 %v43
    %133 = vmatprep.subr.mxu0 0.0
    %134 = vmatpush1.msra.mxu0 %v44
    %135 = vmatprep.subr.mxu0 0.0
    %136 = vmatpush1.msra.mxu0 0.0
    %137 = vmatprep.subr.mxu0 0.0
    %138 = vmatpush1.msra.mxu0 0.0
    %139 = vmatprep.subr.mxu0 0.0
    %140 = vmatpush1.msra.mxu0 0.0
    %141 = vmatprep.subr.mxu0 0.0
    %142 = vmatpush1.msra.mxu0 0.0
    %143 = vmatprep.subr.mxu0 0.0
    %144 = vmatpush1.msra.mxu0 0.0
    %145 = vmatprep.subr.mxu0 0.0
    %146 = vmatpush1.msra.mxu0 0.0
    %147 = vmatprep.subr.mxu0 0.0
    %148 = vmatpush1.msra.mxu0 0.0
    %149 = vmatprep.subr.mxu0 0.0
    %150 = vmatpush1.msra.mxu0 0.0
    %151 = vmatprep.subr.mxu0 0.0
    %152 = vmatpush1.msra.mxu0 0.0
    %153 = vmatprep.subr.mxu0 0.0
    %154 = vmatpush1.msra.mxu0 0.0
    %155 = vmatprep.subr.mxu0 0.0
    %156 = vmatpush1.msra.mxu0 0.0
    %157 = vmatprep.subr.mxu0 0.0
    %158 = vmatpush1.msra.mxu0 0.0
    %159 = vmatprep.subr.mxu0 0.0
    %160 = vmatpush1.msra.mxu0 0.0
    %161 = vmatprep.subr.mxu0 0.0
    %162 = vmatpush1.msra.mxu0 0.0
    %163 = vmatprep.subr.mxu0 0.0
    %164 = vmatpush1.msra.mxu0 0.0
    %165 = vmatprep.subr.mxu0 0.0
    %166 = vmatpush1.msra.mxu0 0.0
    %167 = vmatprep.subr.mxu0 0.0
    %168 = vmatpush1.msra.mxu0 0.0
    %169 = vmatprep.subr.mxu0 0.0
    %170 = vmatpush1.msra.mxu0 0.0
    %171 = vmatprep.subr.mxu0 0.0
    %172 = vmatpush1.msra.mxu0 0.0
    %173 = vmatprep.subr.mxu0 0.0
    %174 = vmatpush1.msra.mxu0 0.0
    %175 = vmatprep.subr.mxu0 0.0
    %176 = vmatpush1.msra.mxu0 0.0
    %177 = vmatprep.subr.mxu0 0.0
    %178 = vmatpush1.msra.mxu0 0.0
    %179 = vmatprep.subr.mxu0 0.0
    %180 = vmatpush1.msra.mxu0 0.0
    %181 = vmatprep.subr.mxu0 0.0
    %182 = vmatpush1.msra.mxu0 0.0
    %183 = vmatprep.subr.mxu0 0.0
    %184 = vmatpush1.msra.mxu0 0.0
    %185 = vmatprep.subr.mxu0 0.0
    %186 = vmatpush1.msra.mxu0 0.0
    %187 = vmatprep.subr.mxu0 0.0
    %188 = vmatpush1.msra.mxu0 0.0
    %189 = vmatprep.subr.mxu0 0.0
    %190 = vmatpush1.msra.mxu0 0.0
    %191 = vmatprep.mubr.f32.mxu0 0.0
    %192 = vmatmul.mubr.f32.gmra.mrb[0].mxu0 %v125
    %v193 = vpop.f32.mrb[0].mxu0
    %v194 = vadd.f32 0.0, %v193
    %v195 = vpop.f32.mrb[0].mxu0
    %196 = vdwg.mxu0
    %v197 = vadd.f32 %v121, %v194
    %v198 = vxor.u32 %v197, 2147483648
    %v199 = vmul.f32 %v198, 1.442695
    %v200 = vpow.pop %v199
    %v201 = vadd.f32 %v200, 1.0
    %v202 = vrcp.pop %v201
    %v203 = vmul.f32 1.0, %v202
    %v204 = vtanh.pop %v197
    %v205 = vmul.f32 %v203, 0.0
    %207 = vrot.lane.b32.xlu0 %v204, 64
    %v208 = vpop.permute.xlu0 %207
    %v210 = vmul.f32 %v203, %v208
    %212 = vrot.lane.b32.xlu0 %v210, 32
    %v213 = vpop.permute.xlu0 %212
    %v215 = vadd.f32 %v205, %v213
    %v216 = vtanh.pop %v215
    %218 = vrot.lane.b32.xlu0 %v216, 64
    %v219 = vpop.permute.xlu0 %218
    %v221 = vmul.f32 %v203, %v219
    %223 = vrot.lane.b32.xlu0 %v221, 32
    %v224 = vpop.permute.xlu0 %223
    %v225 = vsel %vm50, %v224, 0
    %227 = vmatprep.subr.mxu0 0.0
    %228 = vmatpush1.msra.mxu0 %v41
    %229 = vmatprep.subr.mxu0 0.0
    %230 = vmatpush1.msra.mxu0 %v42
    %231 = vmatprep.subr.mxu0 0.0
    %232 = vmatpush1.msra.mxu0 %v43
    %233 = vmatprep.subr.mxu0 0.0
    %234 = vmatpush1.msra.mxu0 %v44
    %235 = vmatprep.subr.mxu0 0.0
    %236 = vmatpush1.msra.mxu0 0.0
    %237 = vmatprep.subr.mxu0 0.0
    %238 = vmatpush1.msra.mxu0 0.0
    %239 = vmatprep.subr.mxu0 0.0
    %240 = vmatpush1.msra.mxu0 0.0
    %241 = vmatprep.subr.mxu0 0.0
    %242 = vmatpush1.msra.mxu0 0.0
    %243 = vmatprep.subr.mxu0 0.0
    %244 = vmatpush1.msra.mxu0 0.0
    %245 = vmatprep.subr.mxu0 0.0
    %246 = vmatpush1.msra.mxu0 0.0
    %247 = vmatprep.subr.mxu0 0.0
    %248 = vmatpush1.msra.mxu0 0.0
    %249 = vmatprep.subr.mxu0 0.0
    %250 = vmatpush1.msra.mxu0 0.0
    %251 = vmatprep.subr.mxu0 0.0
    %252 = vmatpush1.msra.mxu0 0.0
    %253 = vmatprep.subr.mxu0 0.0
    %254 = vmatpush1.msra.mxu0 0.0
    %255 = vmatprep.subr.mxu0 0.0
    %256 = vmatpush1.msra.mxu0 0.0
    %257 = vmatprep.subr.mxu0 0.0
    %258 = vmatpush1.msra.mxu0 0.0
    %259 = vmatprep.subr.mxu0 0.0
    %260 = vmatpush1.msra.mxu0 0.0
    %261 = vmatprep.subr.mxu0 0.0
    %262 = vmatpush1.msra.mxu0 0.0
    %263 = vmatprep.subr.mxu0 0.0
    %264 = vmatpush1.msra.mxu0 0.0
    %265 = vmatprep.subr.mxu0 0.0
    %266 = vmatpush1.msra.mxu0 0.0
    %267 = vmatprep.subr.mxu0 0.0
    %268 = vmatpush1.msra.mxu0 0.0
    %269 = vmatprep.subr.mxu0 0.0
    %270 = vmatpush1.msra.mxu0 0.0
    %271 = vmatprep.subr.mxu0 0.0
    %272 = vmatpush1.msra.mxu0 0.0
    %273 = vmatprep.subr.mxu0 0.0
    %274 = vmatpush1.msra.mxu0 0.0
    %275 = vmatprep.subr.mxu0 0.0
    %276 = vmatpush1.msra.mxu0 0.0
    %277 = vmatprep.subr.mxu0 0.0
    %278 = vmatpush1.msra.mxu0 0.0
    %279 = vmatprep.subr.mxu0 0.0
    %280 = vmatpush1.msra.mxu0 0.0
    %281 = vmatprep.subr.mxu0 0.0
    %282 = vmatpush1.msra.mxu0 0.0
    %283 = vmatprep.subr.mxu0 0.0
    %284 = vmatpush1.msra.mxu0 0.0
    %285 = vmatprep.subr.mxu0 0.0
    %286 = vmatpush1.msra.mxu0 0.0
    %287 = vmatprep.subr.mxu0 0.0
    %288 = vmatpush1.msra.mxu0 0.0
    %289 = vmatprep.subr.mxu0 0.0
    %290 = vmatpush1.msra.mxu0 0.0
    %291 = vmatprep.mubr.f32.mxu0 0.0
    %292 = vmatmul.mubr.f32.gmra.mrb[0].mxu0 %v225
    %v293 = vpop.f32.mrb[0].mxu0
    %v294 = vadd.f32 0.0, %v293
    %v295 = vpop.f32.mrb[0].mxu0
    %296 = vdwg.mxu0
    %v298 = vrot.slane %v294, 7
    %v300 = vadd.f32 %v121, %v298
    %v301 = vxor.u32 %v300, 2147483648
    %v302 = vmul.f32 %v301, 1.442695
    %v303 = vpow.pop %v302
    %v304 = vadd.f32 %v303, 1.0
    %v305 = vrcp.pop %v304
    %v306 = vmul.f32 1.0, %v305
    %v307 = vtanh.pop %v300
    %v309 = vrot.slane %v215, 7
    %v311 = vmul.f32 %v306, %v309
    %313 = vrot.lane.b32.xlu0 %v307, 64
    %v314 = vpop.permute.xlu0 %313
    %v316 = vmul.f32 %v306, %v314
    %318 = vrot.lane.b32.xlu0 %v316, 32
    %v319 = vpop.permute.xlu0 %318
    %v321 = vadd.f32 %v311, %v319
    %v322 = vtanh.pop %v321
    %324 = vrot.lane.b32.xlu0 %v322, 64
    %v325 = vpop.permute.xlu0 %324
    %v327 = vmul.f32 %v306, %v325
    %v329 = vrot.slane %v327, 1
    %330 = vrot.lane.b32.xlu0 %v329, 32
    %v331 = vpop.permute.xlu0 %330
    %v332 = vsel %vm50, %v331, 0
    %334 = vmatprep.subr.mxu0 0.0
    %335 = vmatpush1.msra.mxu0 %v41
    %336 = vmatprep.subr.mxu0 0.0
    %337 = vmatpush1.msra.mxu0 %v42
    %338 = vmatprep.subr.mxu0 0.0
    %339 = vmatpush1.msra.mxu0 %v43
    %340 = vmatprep.subr.mxu0 0.0
    %341 = vmatpush1.msra.mxu0 %v44
    %342 = vmatprep.subr.mxu0 0.0
    %343 = vmatpush1.msra.mxu0 0.0
    %344 = vmatprep.subr.mxu0 0.0
    %345 = vmatpush1.msra.mxu0 0.0
    %346 = vmatprep.subr.mxu0 0.0
    %347 = vmatpush1.msra.mxu0 0.0
    %348 = vmatprep.subr.mxu0 0.0
    %349 = vmatpush1.msra.mxu0 0.0
    %350 = vmatprep.subr.mxu0 0.0
    %351 = vmatpush1.msra.mxu0 0.0
    %352 = vmatprep.subr.mxu0 0.0
    %353 = vmatpush1.msra.mxu0 0.0
    %354 = vmatprep.subr.mxu0 0.0
    %355 = vmatpush1.msra.mxu0 0.0
    %356 = vmatprep.subr.mxu0 0.0
    %357 = vmatpush1.msra.mxu0 0.0
    %358 = vmatprep.subr.mxu0 0.0
    %359 = vmatpush1.msra.mxu0 0.0
    %360 = vmatprep.subr.mxu0 0.0
    %361 = vmatpush1.msra.mxu0 0.0
    %362 = vmatprep.subr.mxu0 0.0
    %363 = vmatpush1.msra.mxu0 0.0
    %364 = vmatprep.subr.mxu0 0.0
    %365 = vmatpush1.msra.mxu0 0.0
    %366 = vmatprep.subr.mxu0 0.0
    %367 = vmatpush1.msra.mxu0 0.0
    %368 = vmatprep.subr.mxu0 0.0
    %369 = vmatpush1.msra.mxu0 0.0
    %370 = vmatprep.subr.mxu0 0.0
    %371 = vmatpush1.msra.mxu0 0.0
    %372 = vmatprep.subr.mxu0 0.0
    %373 = vmatpush1.msra.mxu0 0.0
    %374 = vmatprep.subr.mxu0 0.0
    %375 = vmatpush1.msra.mxu0 0.0
    %376 = vmatprep.subr.mxu0 0.0
    %377 = vmatpush1.msra.mxu0 0.0
    %378 = vmatprep.subr.mxu0 0.0
    %379 = vmatpush1.msra.mxu0 0.0
    %380 = vmatprep.subr.mxu0 0.0
    %381 = vmatpush1.msra.mxu0 0.0
    %382 = vmatprep.subr.mxu0 0.0
    %383 = vmatpush1.msra.mxu0 0.0
    %384 = vmatprep.subr.mxu0 0.0
    %385 = vmatpush1.msra.mxu0 0.0
    %386 = vmatprep.subr.mxu0 0.0
    %387 = vmatpush1.msra.mxu0 0.0
    %388 = vmatprep.subr.mxu0 0.0
    %389 = vmatpush1.msra.mxu0 0.0
    %390 = vmatprep.subr.mxu0 0.0
    %391 = vmatpush1.msra.mxu0 0.0
    %392 = vmatprep.subr.mxu0 0.0
    %393 = vmatpush1.msra.mxu0 0.0
    %394 = vmatprep.subr.mxu0 0.0
    %395 = vmatpush1.msra.mxu0 0.0
    %396 = vmatprep.subr.mxu0 0.0
    %397 = vmatpush1.msra.mxu0 0.0
    %398 = vmatprep.mubr.f32.mxu0 0.0
    %399 = vmatmul.mubr.f32.gmra.mrb[0].mxu0 %v332
    %v400 = vpop.f32.mrb[0].mxu0
    %v401 = vadd.f32 0.0, %v400
    %v402 = vpop.f32.mrb[0].mxu0
    %403 = vdwg.mxu0
    %v405 = vrot.slane %v401, 6
    %v407 = vadd.f32 %v121, %v405
    %v408 = vxor.u32 %v407, 2147483648
    %v409 = vmul.f32 %v408, 1.442695
    %v410 = vpow.pop %v409
    %v411 = vadd.f32 %v410, 1.0
    %v412 = vrcp.pop %v411
    %v413 = vmul.f32 1.0, %v412
    %v414 = vtanh.pop %v407
    %v416 = vrot.slane %v321, 7
    %v418 = vmul.f32 %v413, %v416
    %420 = vrot.lane.b32.xlu0 %v414, 64
    %v421 = vpop.permute.xlu0 %420
    %v423 = vmul.f32 %v413, %v421
    %425 = vrot.lane.b32.xlu0 %v423, 32
    %v426 = vpop.permute.xlu0 %425
    %v428 = vadd.f32 %v418, %v426
    %v429 = vtanh.pop %v428
    %431 = vrot.lane.b32.xlu0 %v429, 64
    %v432 = vpop.permute.xlu0 %431
    %v434 = vmul.f32 %v413, %v432
    %v436 = vrot.slane %v434, 2
    %437 = vrot.lane.b32.xlu0 %v436, 32
    %v438 = vpop.permute.xlu0 %437
    %v439 = vsel %vm50, %v438, 0
    %441 = vmatprep.subr.mxu0 0.0
    %442 = vmatpush1.msra.mxu0 %v41
    %443 = vmatprep.subr.mxu0 0.0
    %444 = vmatpush1.msra.mxu0 %v42
    %445 = vmatprep.subr.mxu0 0.0
    %446 = vmatpush1.msra.mxu0 %v43
    %447 = vmatprep.subr.mxu0 0.0
    %448 = vmatpush1.msra.mxu0 %v44
    %449 = vmatprep.subr.mxu0 0.0
    %450 = vmatpush1.msra.mxu0 0.0
    %451 = vmatprep.subr.mxu0 0.0
    %452 = vmatpush1.msra.mxu0 0.0
    %453 = vmatprep.subr.mxu0 0.0
    %454 = vmatpush1.msra.mxu0 0.0
    %455 = vmatprep.subr.mxu0 0.0
    %456 = vmatpush1.msra.mxu0 0.0
    %457 = vmatprep.subr.mxu0 0.0
    %458 = vmatpush1.msra.mxu0 0.0
    %459 = vmatprep.subr.mxu0 0.0
    %460 = vmatpush1.msra.mxu0 0.0
    %461 = vmatprep.subr.mxu0 0.0
    %462 = vmatpush1.msra.mxu0 0.0
    %463 = vmatprep.subr.mxu0 0.0
    %464 = vmatpush1.msra.mxu0 0.0
    %465 = vmatprep.subr.mxu0 0.0
    %466 = vmatpush1.msra.mxu0 0.0
    %467 = vmatprep.subr.mxu0 0.0
    %468 = vmatpush1.msra.mxu0 0.0
    %469 = vmatprep.subr.mxu0 0.0
    %470 = vmatpush1.msra.mxu0 0.0
    %471 = vmatprep.subr.mxu0 0.0
    %472 = vmatpush1.msra.mxu0 0.0
    %473 = vmatprep.subr.mxu0 0.0
    %474 = vmatpush1.msra.mxu0 0.0
    %475 = vmatprep.subr.mxu0 0.0
    %476 = vmatpush1.msra.mxu0 0.0
    %477 = vmatprep.subr.mxu0 0.0
    %478 = vmatpush1.msra.mxu0 0.0
    %479 = vmatprep.subr.mxu0 0.0
    %480 = vmatpush1.msra.mxu0 0.0
    %481 = vmatprep.subr.mxu0 0.0
    %482 = vmatpush1.msra.mxu0 0.0
    %483 = vmatprep.subr.mxu0 0.0
    %484 = vmatpush1.msra.mxu0 0.0
    %485 = vmatprep.subr.mxu0 0.0
    %486 = vmatpush1.msra.mxu0 0.0
    %487 = vmatprep.subr.mxu0 0.0
    %488 = vmatpush1.msra.mxu0 0.0
    %489 = vmatprep.subr.mxu0 0.0
    %490 = vmatpush1.msra.mxu0 0.0
    %491 = vmatprep.subr.mxu0 0.0
    %492 = vmatpush1.msra.mxu0 0.0
    %493 = vmatprep.subr.mxu0 0.0
    %494 = vmatpush1.msra.mxu0 0.0
    %495 = vmatprep.subr.mxu0 0.0
    %496 = vmatpush1.msra.mxu0 0.0
    %497 = vmatprep.subr.mxu0 0.0
    %498 = vmatpush1.msra.mxu0 0.0
    %499 = vmatprep.subr.mxu0 0.0
    %500 = vmatpush1.msra.mxu0 0.0
    %501 = vmatprep.subr.mxu0 0.0
    %502 = vmatpush1.msra.mxu0 0.0
    %503 = vmatprep.subr.mxu0 0.0
    %504 = vmatpush1.msra.mxu0 0.0
    %505 = vmatprep.mubr.f32.mxu0 0.0
    %506 = vmatmul.mubr.f32.gmra.mrb[0].mxu0 %v439
    %v507 = vpop.f32.mrb[0].mxu0
    %v508 = vadd.f32 0.0, %v507
    %v509 = vpop.f32.mrb[0].mxu0
    %510 = vdwg.mxu0
    %v512 = vrot.slane %v508, 5
    %v514 = vadd.f32 %v121, %v512
    %v515 = vxor.u32 %v514, 2147483648
    %v516 = vmul.f32 %v515, 1.442695
    %v517 = vpow.pop %v516
    %v518 = vadd.f32 %v517, 1.0
    %v519 = vrcp.pop %v518
    %v520 = vmul.f32 1.0, %v519
    %v521 = vtanh.pop %v514
    %v523 = vrot.slane %v428, 7
    %v525 = vmul.f32 %v520, %v523
    %527 = vrot.lane.b32.xlu0 %v521, 64
    %v528 = vpop.permute.xlu0 %527
    %v530 = vmul.f32 %v520, %v528
    %532 = vrot.lane.b32.xlu0 %v530, 32
    %v533 = vpop.permute.xlu0 %532
    %v535 = vadd.f32 %v525, %v533
    %v536 = vtanh.pop %v535
    %538 = vrot.lane.b32.xlu0 %v536, 64
    %v539 = vpop.permute.xlu0 %538
    %v541 = vmul.f32 %v520, %v539
    %vm542 = vcmask 1040384
    %v543 = vsel %vm542, %v221, %v327
    %vm544 = vcmask 1041408
    %v545 = vsel %vm544, %v543, %v434
    %vm546 = vcmask 1042432
    %v547 = vsel %vm546, %v545, %v541
    %v548 = vld [vmem:[%s3] sm:$0xff]
    %v549 = vld [vmem:[%s3 + $0x8] sm:$0xff]
    %v550 = vld [vmem:[%s3 + $0x10] sm:$0xff]
    %v551 = vld [vmem:[%s3 + $0x18] sm:$0xff]
    %v552 = vld [vmem:[%s3 + $0x20] sm:$0xff]
    %v553 = vld [vmem:[%s3 + $0x28] sm:$0xff]
    %v554 = vld [vmem:[%s3 + $0x30] sm:$0xff]
    %v555 = vld [vmem:[%s3 + $0x38] sm:$0xff]
    %v556 = vld [vmem:[%s3 + $0x40] sm:$0xff]
    %v557 = vld [vmem:[%s3 + $0x48] sm:$0xff]
    %v558 = vld [vmem:[%s3 + $0x50] sm:$0xff]
    %v559 = vld [vmem:[%s3 + $0x58] sm:$0xff]
    %v560 = vld [vmem:[%s3 + $0x60] sm:$0x1]
    %562 = vrot.lane.b32.xlu0 %v547, 32
    %v563 = vpop.permute.xlu0 %562
    %565 = vrot.lane.b32.xlu0 %v35, 32
    %v566 = vpop.permute.xlu0 %565
    %569 = vrot.lane.b32.xlu0 %v36, 64
    %v570 = vpop.permute.xlu0 %569
    %v572 = vsel %vm50, %v563, %v566
    %vm573 = vcmask 523264
    %v574 = vsel %vm573, %v572, %v570
    %v575 = vlaneseq
    %v576 = vshrl.u32 %v575, 7
    %v577 = vsub.s32 0, %v576
    %v578 = vrot.slane %v560, %v577
    %vm579 = vcmask 785408
    %v581 = vsel %vm579, %v574, 0
    %583 = vmatprep.subr.mxu0 0.0
    %584 = vmatpush1.msra.mxu0 %v548
    %585 = vmatprep.subr.mxu0 0.0
    %586 = vmatpush1.msra.mxu0 %v549
    %587 = vmatprep.subr.mxu0 0.0
    %588 = vmatpush1.msra.mxu0 %v550
    %589 = vmatprep.subr.mxu0 0.0
    %590 = vmatpush1.msra.mxu0 %v551
    %591 = vmatprep.subr.mxu0 0.0
    %592 = vmatpush1.msra.mxu0 %v552
    %593 = vmatprep.subr.mxu0 0.0
    %594 = vmatpush1.msra.mxu0 %v553
    %595 = vmatprep.subr.mxu0 0.0
    %596 = vmatpush1.msra.mxu0 %v554
    %597 = vmatprep.subr.mxu0 0.0
    %598 = vmatpush1.msra.mxu0 %v555
    %599 = vmatprep.subr.mxu0 0.0
    %600 = vmatpush1.msra.mxu0 %v556
    %601 = vmatprep.subr.mxu0 0.0
    %602 = vmatpush1.msra.mxu0 %v557
    %603 = vmatprep.subr.mxu0 0.0
    %604 = vmatpush1.msra.mxu0 %v558
    %605 = vmatprep.subr.mxu0 0.0
    %606 = vmatpush1.msra.mxu0 %v559
    %607 = vmatprep.subr.mxu0 0.0
    %608 = vmatpush1.msra.mxu0 0.0
    %609 = vmatprep.subr.mxu0 0.0
    %610 = vmatpush1.msra.mxu0 0.0
    %611 = vmatprep.subr.mxu0 0.0
    %612 = vmatpush1.msra.mxu0 0.0
    %613 = vmatprep.subr.mxu0 0.0
    %614 = vmatpush1.msra.mxu0 0.0
    %615 = vmatprep.subr.mxu0 0.0
    %616 = vmatpush1.msra.mxu0 0.0
    %617 = vmatprep.subr.mxu0 0.0
    %618 = vmatpush1.msra.mxu0 0.0
    %619 = vmatprep.subr.mxu0 0.0
    %620 = vmatpush1.msra.mxu0 0.0
    %621 = vmatprep.subr.mxu0 0.0
    %622 = vmatpush1.msra.mxu0 0.0
    %623 = vmatprep.subr.mxu0 0.0
    %624 = vmatpush1.msra.mxu0 0.0
    %625 = vmatprep.subr.mxu0 0.0
    %626 = vmatpush1.msra.mxu0 0.0
    %627 = vmatprep.subr.mxu0 0.0
    %628 = vmatpush1.msra.mxu0 0.0
    %629 = vmatprep.subr.mxu0 0.0
    %630 = vmatpush1.msra.mxu0 0.0
    %631 = vmatprep.subr.mxu0 0.0
    %632 = vmatpush1.msra.mxu0 0.0
    %633 = vmatprep.subr.mxu0 0.0
    %634 = vmatpush1.msra.mxu0 0.0
    %635 = vmatprep.subr.mxu0 0.0
    %636 = vmatpush1.msra.mxu0 0.0
    %637 = vmatprep.subr.mxu0 0.0
    %638 = vmatpush1.msra.mxu0 0.0
    %639 = vmatprep.subr.mxu0 0.0
    %640 = vmatpush1.msra.mxu0 0.0
    %641 = vmatprep.subr.mxu0 0.0
    %642 = vmatpush1.msra.mxu0 0.0
    %643 = vmatprep.subr.mxu0 0.0
    %644 = vmatpush1.msra.mxu0 0.0
    %645 = vmatprep.subr.mxu0 0.0
    %646 = vmatpush1.msra.mxu0 0.0
    %647 = vmatprep.mubr.f32.mxu0 0.0
    %648 = vmatmul.mubr.f32.gmra.mrb[0].mxu0 %v581
    %v649 = vpop.f32.mrb[0].mxu0
    %v650 = vadd.f32 %v578, %v649
    %v651 = vpop.f32.mrb[0].mxu0
    %652 = vdwg.mxu0
    %vm653 = vcmask 257024
    %v654 = vsel %vm653, %v650, 0.0
    %655 = vadd.xlane.f32.xlu0 %v654
    %v656 = vpop.xlane.xlu0 %655
    %v657 = vrot.slane %v656, 4
    %v658 = vadd.f32 %v656, %v657
    %v659 = vrot.slane %v658, 2
    %v660 = vadd.f32 %v658, %v659
    %v661 = vrot.slane %v660, 1
    %v662 = vadd.f32 %v660, %v661
    %s663 = vtos %v662
    %v664 = vmul.f32 %v650, %v650
    %v665 = vsel %vm653, %v664, 0.0
    %666 = vadd.xlane.f32.xlu0 %v665
    %v667 = vpop.xlane.xlu0 %666
    %v668 = vrot.slane %v667, 4
    %v669 = vadd.f32 %v667, %v668
    %v670 = vrot.slane %v669, 2
    %v671 = vadd.f32 %v669, %v670
    %v672 = vrot.slane %v671, 1
    %v673 = vadd.f32 %v671, %v672
    %s674 = vtos %v673
    %s675 = smul.f32 %s663, 0.0078125
    %s676 = smul.f32 %s674, 0.0078125
    %s677 = smul.f32 %s675, %s675
    %s678 = ssub.f32 %s676, %s677
    %s679 = smax.f32 %s678, 0.0
    %v680 = vstv %s675
    %v681 = vsub.f32 %v650, %v680
    %s682 = sadd.f32 %s679, 1e-05
    %v683 = vstv %s682
    %v684 = vrsqrt.pop %v683
    %s685 = vtos %v684
    %v686 = vstv %s685
    %v687 = vmul.f32 %v681, %v686
    %689 = vrot.lane.b32.xlu0 %v650, 96
    %v690 = vpop.permute.xlu0 %689
    %v692 = vsel %vm653, %v690, 0.0
    %693 = vadd.xlane.f32.xlu0 %v692
    %v694 = vpop.xlane.xlu0 %693
    %v695 = vrot.slane %v694, 4
    %v696 = vadd.f32 %v694, %v695
    %v697 = vrot.slane %v696, 2
    %v698 = vadd.f32 %v696, %v697
    %v699 = vrot.slane %v698, 1
    %v700 = vadd.f32 %v698, %v699
    %s701 = vtos %v700
    %703 = vrot.lane.b32.xlu0 %v664, 96
    %v704 = vpop.permute.xlu0 %703
    %v706 = vsel %vm653, %v704, 0.0
    %707 = vadd.xlane.f32.xlu0 %v706
    %v708 = vpop.xlane.xlu0 %707
    %v709 = vrot.slane %v708, 4
    %v710 = vadd.f32 %v708, %v709
    %v711 = vrot.slane %v710, 2
    %v712 = vadd.f32 %v710, %v711
    %v713 = vrot.slane %v712, 1
    %v714 = vadd.f32 %v712, %v713
    %s715 = vtos %v714
    %s716 = smul.f32 %s701, 0.0078125
    %s717 = smul.f32 %s715, 0.0078125
    %s718 = smul.f32 %s716, %s716
    %s719 = ssub.f32 %s717, %s718
    %s720 = smax.f32 %s719, 0.0
    %v721 = vstv %s716
    %v722 = vsub.f32 %v650, %v721
    %s723 = sadd.f32 %s720, 1e-05
    %v724 = vstv %s723
    %v725 = vrsqrt.pop %v724
    %s726 = vtos %v725
    %v727 = vstv %s726
    %v728 = vmul.f32 %v722, %v727
    %729 = vrot.lane.b32.xlu0 %v650, 64
    %v730 = vpop.permute.xlu0 %729
    %v732 = vsel %vm653, %v730, 0.0
    %733 = vadd.xlane.f32.xlu0 %v732
    %v734 = vpop.xlane.xlu0 %733
    %v735 = vrot.slane %v734, 4
    %v736 = vadd.f32 %v734, %v735
    %v737 = vrot.slane %v736, 2
    %v738 = vadd.f32 %v736, %v737
    %v739 = vrot.slane %v738, 1
    %v740 = vadd.f32 %v738, %v739
    %s741 = vtos %v740
    %742 = vrot.lane.b32.xlu0 %v664, 64
    %v743 = vpop.permute.xlu0 %742
    %v745 = vsel %vm653, %v743, 0.0
    %746 = vadd.xlane.f32.xlu0 %v745
    %v747 = vpop.xlane.xlu0 %746
    %v748 = vrot.slane %v747, 4
    %v749 = vadd.f32 %v747, %v748
    %v750 = vrot.slane %v749, 2
    %v751 = vadd.f32 %v749, %v750
    %v752 = vrot.slane %v751, 1
    %v753 = vadd.f32 %v751, %v752
    %s754 = vtos %v753
    %s755 = smul.f32 %s741, 0.0078125
    %s756 = smul.f32 %s754, 0.0078125
    %s757 = smul.f32 %s755, %s755
    %s758 = ssub.f32 %s756, %s757
    %s759 = smax.f32 %s758, 0.0
    %v760 = vstv %s755
    %v761 = vsub.f32 %v650, %v760
    %s762 = sadd.f32 %s759, 1e-05
    %v763 = vstv %s762
    %v764 = vrsqrt.pop %v763
    %s765 = vtos %v764
    %v766 = vstv %s765
    %v767 = vmul.f32 %v761, %v766
    %768 = vrot.lane.b32.xlu0 %v650, 32
    %v769 = vpop.permute.xlu0 %768
    %v771 = vsel %vm653, %v769, 0.0
    %772 = vadd.xlane.f32.xlu0 %v771
    %v773 = vpop.xlane.xlu0 %772
    %v774 = vrot.slane %v773, 4
    %v775 = vadd.f32 %v773, %v774
    %v776 = vrot.slane %v775, 2
    %v777 = vadd.f32 %v775, %v776
    %v778 = vrot.slane %v777, 1
    %v779 = vadd.f32 %v777, %v778
    %s780 = vtos %v779
    %781 = vrot.lane.b32.xlu0 %v664, 32
    %v782 = vpop.permute.xlu0 %781
    %v784 = vsel %vm653, %v782, 0.0
    %785 = vadd.xlane.f32.xlu0 %v784
    %v786 = vpop.xlane.xlu0 %785
    %v787 = vrot.slane %v786, 4
    %v788 = vadd.f32 %v786, %v787
    %v789 = vrot.slane %v788, 2
    %v790 = vadd.f32 %v788, %v789
    %v791 = vrot.slane %v790, 1
    %v792 = vadd.f32 %v790, %v791
    %s793 = vtos %v792
    %s794 = smul.f32 %s780, 0.0078125
    %s795 = smul.f32 %s793, 0.0078125
    %s796 = smul.f32 %s794, %s794
    %s797 = ssub.f32 %s795, %s796
    %s798 = smax.f32 %s797, 0.0
    %v799 = vstv %s794
    %v800 = vsub.f32 %v650, %v799
    %s801 = sadd.f32 %s798, 1e-05
    %v802 = vstv %s801
    %v803 = vrsqrt.pop %v802
    %s804 = vtos %v803
    %v805 = vstv %s804
    %v806 = vmul.f32 %v800, %v805
    %808 = vrot.lane.b32.xlu0 %v728, 96
    %v809 = vpop.permute.xlu0 %808
    %v811 = vadd.f32 %v687, %v809
    %813 = vrot.lane.b32.xlu0 %v806, 96
    %v814 = vpop.permute.xlu0 %813
    %v816 = vadd.f32 %v767, %v814
    %818 = vrot.lane.b32.xlu0 %v816, 96
    %v819 = vpop.permute.xlu0 %818
    %v821 = vsel %vm50, %v811, %v819
    %v822 = vxor.u32 %v821, 2147483648
    %v823 = vmul.f32 %v822, 1.442695
    %v824 = vpow.pop %v823
    %v825 = vadd.f32 %v824, 1.0
    %v826 = vrcp.pop %v825
    %v827 = vmul.f32 1.0, %v826
    %v828 = vld [vmem:[%s4] sm:$0xff]
    %v829 = vld [vmem:[%s4 + $0x8] sm:$0xff]
    %v830 = vld [vmem:[%s4 + $0x10] sm:$0xff]
    %v831 = vld [vmem:[%s4 + $0x18] sm:$0xff]
    %v832 = vld [vmem:[%s4 + $0x20] sm:$0xff]
    %v833 = vld [vmem:[%s4 + $0x28] sm:$0xff]
    %v834 = vld [vmem:[%s4 + $0x30] sm:$0xff]
    %v835 = vld [vmem:[%s4 + $0x38] sm:$0xff]
    %v836 = vld [vmem:[%s4 + $0x40] sm:$0x1]
    %v837 = vlaneseq
    %v838 = vshrl.u32 %v837, 7
    %v839 = vsub.s32 0, %v838
    %v840 = vrot.slane %v836, %v839
    %v842 = vsel %vm573, %v827, 0
    %844 = vmatprep.subr.mxu0 0.0
    %845 = vmatpush1.msra.mxu0 %v828
    %846 = vmatprep.subr.mxu0 0.0
    %847 = vmatpush1.msra.mxu0 %v829
    %848 = vmatprep.subr.mxu0 0.0
    %849 = vmatpush1.msra.mxu0 %v830
    %850 = vmatprep.subr.mxu0 0.0
    %851 = vmatpush1.msra.mxu0 %v831
    %852 = vmatprep.subr.mxu0 0.0
    %853 = vmatpush1.msra.mxu0 %v832
    %854 = vmatprep.subr.mxu0 0.0
    %855 = vmatpush1.msra.mxu0 %v833
    %856 = vmatprep.subr.mxu0 0.0
    %857 = vmatpush1.msra.mxu0 %v834
    %858 = vmatprep.subr.mxu0 0.0
    %859 = vmatpush1.msra.mxu0 %v835
    %860 = vmatprep.subr.mxu0 0.0
    %861 = vmatpush1.msra.mxu0 0.0
    %862 = vmatprep.subr.mxu0 0.0
    %863 = vmatpush1.msra.mxu0 0.0
    %864 = vmatprep.subr.mxu0 0.0
    %865 = vmatpush1.msra.mxu0 0.0
    %866 = vmatprep.subr.mxu0 0.0
    %867 = vmatpush1.msra.mxu0 0.0
    %868 = vmatprep.subr.mxu0 0.0
    %869 = vmatpush1.msra.mxu0 0.0
    %870 = vmatprep.subr.mxu0 0.0
    %871 = vmatpush1.msra.mxu0 0.0
    %872 = vmatprep.subr.mxu0 0.0
    %873 = vmatpush1.msra.mxu0 0.0
    %874 = vmatprep.subr.mxu0 0.0
    %875 = vmatpush1.msra.mxu0 0.0
    %876 = vmatprep.subr.mxu0 0.0
    %877 = vmatpush1.msra.mxu0 0.0
    %878 = vmatprep.subr.mxu0 0.0
    %879 = vmatpush1.msra.mxu0 0.0
    %880 = vmatprep.subr.mxu0 0.0
    %881 = vmatpush1.msra.mxu0 0.0
    %882 = vmatprep.subr.mxu0 0.0
    %883 = vmatpush1.msra.mxu0 0.0
    %884 = vmatprep.subr.mxu0 0.0
    %885 = vmatpush1.msra.mxu0 0.0
    %886 = vmatprep.subr.mxu0 0.0
    %887 = vmatpush1.msra.mxu0 0.0
    %888 = vmatprep.subr.mxu0 0.0
    %889 = vmatpush1.msra.mxu0 0.0
    %890 = vmatprep.subr.mxu0 0.0
    %891 = vmatpush1.msra.mxu0 0.0
    %892 = vmatprep.subr.mxu0 0.0
    %893 = vmatpush1.msra.mxu0 0.0
    %894 = vmatprep.subr.mxu0 0.0
    %895 = vmatpush1.msra.mxu0 0.0
    %896 = vmatprep.subr.mxu0 0.0
    %897 = vmatpush1.msra.mxu0 0.0
    %898 = vmatprep.subr.mxu0 0.0
    %899 = vmatpush1.msra.mxu0 0.0
    %900 = vmatprep.subr.mxu0 0.0
    %901 = vmatpush1.msra.mxu0 0.0
    %902 = vmatprep.subr.mxu0 0.0
    %903 = vmatpush1.msra.mxu0 0.0
    %904 = vmatprep.subr.mxu0 0.0
    %905 = vmatpush1.msra.mxu0 0.0
    %906 = vmatprep.subr.mxu0 0.0
    %907 = vmatpush1.msra.mxu0 0.0
    %908 = vmatprep.mubr.f32.mxu0 0.0
    %909 = vmatmul.mubr.f32.gmra.mrb[0].mxu0 %v842
    %v910 = vpop.f32.mrb[0].mxu0
    %v911 = vadd.f32 %v840, %v910
    %v912 = vpop.f32.mrb[0].mxu0
    %913 = vdwg.mxu0
    %v914 = vlaneseq
    %v915 = vshrl.u32 %v914, 7
    %v916 = vsub.s32 3, %v915
    %v917 = vrot.slane %v535, %v916
    %919 = vrot.lane.b32.xlu0 %v911, 32
    %v920 = vpop.permute.xlu0 %919
    %923 = vrot.lane.b32.xlu0 %v917, 34
    %v924 = vpop.permute.xlu0 %923
    %v926 = vsel %vm50, %v563, %v920
    %vm927 = vcmask 539648
    %v928 = vsel %vm927, %v926, %v924
    %vm929 = vcmask 801792
    %v930 = vsel %vm929, %v928, 0.0
    %vm931 = vcmask 1043456
    %v932 = vsel %vm931, %v930, 0.0
    %933 = vst [vmem:[#allocation5] sm:$0xff] %v932
    // Predicated region
    $region26: #{tpu_custom_call.1} parent=1 // pred_check
      _
    $region27: #{tpu_custom_call.1} parent=1 // pred_check_branch
      %935 = sbr.rel (0) target = $region29
    $region28: #{tpu_custom_call.1} parent=1 // pred_region
      %s937 = ssub.s32 128, 128
      %938 = vsyncadd [#allocation4], %s937
      %s940 = sshll.u32 [#allocation5], 4
      %s941 = int_to_ptr.vmem [resolvable:$true] %s940
      %943 = dma.vmem_to_hbm [thread:$0]  %s941, 128, %s5, [#allocation4]
    $region29: #{tpu_custom_call.1} parent=1 // pred_fallthru
      _
    // Predicated region
    $region30: #{tpu_custom_call.1} parent=1 // pred_check
      _
    $region31: #{tpu_custom_call.1} parent=1 // pred_check_branch
      %945 = sbr.rel (0) target = $region33
    $region32: #{tpu_custom_call.1} parent=1 // pred_region
      %946 = dma.done [#allocation4], 128
    $region33: #{tpu_custom_call.1} parent=1 // pred_fallthru
      _
    %947 = vsyncpa [#allocation3], 1
    %948 = vsyncpa [#allocation4], 1

</llo_original>
